<compile_context>
chip_gen: v5e
topology: v5e:2x2
jax: 0.10.0
libtpu: 0.0.40
codegen_flags: <defaults>
</compile_context>

<pallas_src>
import math

import jax
import jax.numpy as jnp
from jax.experimental import pallas as pl
from jax.experimental.pallas import tpu as pltpu


def _layer_scale_kernel(x_ref, gamma_ref, o_ref):
    # x_ref: (br, bc), gamma_ref: (1, bc) -> VPU sublane-broadcast multiply.
    o_ref[...] = x_ref[...] * gamma_ref[...]


def _round_up(n: int, m: int) -> int:
    return ((n + m - 1) // m) * m


def _round_down(n: int, m: int) -> int:
    return (n // m) * m


def layer_scale(x: jax.Array, gamma: jax.Array, *,
                target_tile_bytes: int = 4 * 1024 * 1024) -> jax.Array:
    """LayerScale: out = x * gamma; x: (..., dim), gamma: (dim,).

    Note: gamma is cast to x.dtype so the output dtype is x.dtype (PyTorch
    type promotion would give f32 for bf16 x with an f32 parameter).
    """
    orig_shape = x.shape
    dim = orig_shape[-1]
    assert gamma.shape == (dim,), f"gamma shape {gamma.shape} != ({dim},)"

    gamma = gamma.astype(x.dtype)

    itemsize = jnp.dtype(x.dtype).itemsize
    sublane = max(8, 32 // itemsize)          # 8 f32 / 16 bf16 / 32 int8

    # Flatten leading axes (free reshape for contiguous channels-last data).
    x2d = x.reshape(-1, dim)
    rows = x2d.shape[0]

    # Lane-dense fold: whenever dim is not a multiple of 128, fold k rows into
    # the lane axis so the kernel's last dim is a multiple of 128 (unmasked
    # vst, no wasted lane bandwidth / vregs). Only applied when rows % k == 0
    # so no padding (no extra HBM pass) is ever needed; otherwise keep
    # lane = dim (full-extent last dim is still a legal block, just masked).
    k = 1
    if dim % 128 != 0:
        kf = math.lcm(dim, 128) // dim
        if kf <= 16 and rows % kf == 0:
            k = kf
    lane = k * dim
    folded_rows = rows // k
    xf = x2d.reshape(folded_rows, lane)
    gamma_f = (jnp.tile(gamma, (k,)) if k > 1 else gamma).reshape(1, lane)

    # ---- Tile selection (~4 MiB tiles: HBM-roofline sweet spot on v5e/v6e,
    # comfortably double-buffered inside v7x's 64 MiB VMEM). ----
    # Column block: full lane if a sublane-height slab fits the budget,
    # otherwise a multiple-of-128 column block (keeps huge dims in budget).
    if sublane * lane * itemsize <= target_tile_bytes:
        bc = lane
    else:
        bc = max(128, _round_down(target_tile_bytes // (sublane * itemsize), 128))
    # Row block: fill the remaining budget, multiple of the sublane pack.
    br = max(sublane, _round_down(target_tile_bytes // (bc * itemsize), sublane))
    if br >= folded_rows:
        br = folded_rows      # single full-extent row block (always legal)

    grid = (pl.cdiv(folded_rows, br), pl.cdiv(lane, bc))

    # VMEM budget: double-buffered in + out tiles + gamma, 2x headroom,
    # capped at 32 MiB (safe on v7x's 64 MiB physical VMEM, explicitly above
    # v5e's 16 MiB default scoped limit).
    tile_bytes = br * bc * itemsize
    vmem_limit = int(min(max(2 * (4 * tile_bytes + 2 * bc * itemsize), 16 << 20),
                         32 << 20))

    out = pl.pallas_call(
        _layer_scale_kernel,
        out_shape=jax.ShapeDtypeStruct((folded_rows, lane), x.dtype),
        grid_spec=pltpu.PrefetchScalarGridSpec(
            num_scalar_prefetch=0,
            grid=grid,
            in_specs=[
                pl.BlockSpec((br, bc), lambda i, j: (i, j)),
                pl.BlockSpec((1, bc), lambda i, j: (0, j)),
            ],
            out_specs=pl.BlockSpec((br, bc), lambda i, j: (i, j)),
        ),
        compiler_params=pltpu.CompilerParams(
            # Both grid axes write independent output blocks.
            # TODO(synk): on v7x, evaluate pltpu.CORE_PARALLEL on the row axis
            # for true 2-TC sharding of this bandwidth-bound multiply.
            dimension_semantics=("parallel", "parallel"),
            vmem_limit_bytes=vmem_limit,
        ),
    )(xf, gamma_f)

    # Free reshapes back to the original layout — no slicing, no extra passes.
    return out.reshape(rows, dim).reshape(orig_shape)


if __name__ == "__main__":
    key = jax.random.PRNGKey(0)

    batch, seq, dim = 2, 8, 32
    init_values = 1e-5

    # Deterministic parameter init (matches nn.Parameter(init_values * ones(dim))).
    gamma = init_values * jnp.ones((dim,), dtype=jnp.float32)

    # --- f32 check (exercises the lane-dense fold: dim=32 -> k=4, lane=128) ---
    x = jax.random.normal(key, (batch, seq, dim), dtype=jnp.float32)
    out = jax.block_until_ready(layer_scale(x, gamma))
    ref = x * gamma
    assert out.shape == x.shape and out.dtype == x.dtype
    assert jnp.allclose(out, ref, atol=1e-7, rtol=1e-6)

    # --- bf16 check (dtype-aware sublane pack / gamma cast path) ---
    x_bf = x.astype(jnp.bfloat16)
    out_bf = jax.block_until_ready(layer_scale(x_bf, gamma))
    ref_bf = x_bf * gamma.astype(jnp.bfloat16)
    assert out_bf.shape == x_bf.shape and out_bf.dtype == x_bf.dtype
    assert jnp.allclose(out_bf.astype(jnp.float32), ref_bf.astype(jnp.float32),
                        atol=1e-6, rtol=1e-2)

    # --- ragged last-row-block check: no pad / no slice, masked stores only
    #     (small target_tile_bytes forces a multi-step grid at small shapes) ---
    x_odd = jax.random.normal(key, (3, 7, 384), dtype=jnp.float32)
    g_odd = init_values * jnp.ones((384,), dtype=jnp.float32)
    out_odd = jax.block_until_ready(
        layer_scale(x_odd, g_odd, target_tile_bytes=8 * 384 * 4))
    assert jnp.allclose(out_odd, x_odd * g_odd, atol=1e-7, rtol=1e-6)

    # --- fold-fallback check: dim % 128 != 0 and rows % k != 0 -> no fold,
    #     full-extent (non-128) last dim block ---
    x_nf = jax.random.normal(key, (3, 5, 40), dtype=jnp.float32)
    g_nf = init_values * jnp.ones((40,), dtype=jnp.float32)
    out_nf = jax.block_until_ready(layer_scale(x_nf, g_nf))
    assert jnp.allclose(out_nf, x_nf * g_nf, atol=1e-7, rtol=1e-6)

    print("KERNEL_OK")
</pallas_src>

<mosaic_0001>
module attributes {stable_mosaic.version = 11 : i64} {
  func.func @_layer_scale_kernel(%arg0: i32, %arg1: i32, %arg2: memref<4x128xf32, #tpu.memory_space<vmem>>, %arg3: memref<1x128xf32, #tpu.memory_space<vmem>>, %arg4: memref<4x128xf32, #tpu.memory_space<vmem>>) attributes {dimension_semantics = [#tpu.dimension_semantics<parallel>, #tpu.dimension_semantics<parallel>], iteration_bounds = array<i64: 1, 1>, scalar_prefetch = 0 : i64, scratch_operands = 0 : i64, tpu.core_type = #tpu.core_type<tc>, window_params = [{transform_indices = @transform_0, window_bounds = array<i64: 4, 128>}, {transform_indices = @transform_1, window_bounds = array<i64: 1, 128>}, {transform_indices = @transform_2, window_bounds = array<i64: 4, 128>}]} {
    %c0 = arith.constant 0 : index
    %c0_0 = arith.constant 0 : index
    %0 = vector.load %arg2[%c0, %c0_0] : memref<4x128xf32, #tpu.memory_space<vmem>>, vector<4x128xf32>
    %c0_1 = arith.constant 0 : index
    %c0_2 = arith.constant 0 : index
    %1 = vector.load %arg3[%c0_1, %c0_2] : memref<1x128xf32, #tpu.memory_space<vmem>>, vector<1x128xf32>
    %2 = vector.broadcast %1 : vector<1x128xf32> to vector<4x128xf32>
    %3 = arith.mulf %0, %2 : vector<4x128xf32>
    %c0_3 = arith.constant 0 : index
    %c0_4 = arith.constant 0 : index
    %4 = vector.load %arg4[%c0_3, %c0_4] : memref<4x128xf32, #tpu.memory_space<vmem>>, vector<4x128xf32>
    tpu.vector_store %arg4[%c0_3, %c0_4], %3 {strides = array<i32>} : memref<4x128xf32, #tpu.memory_space<vmem>>, vector<4x128xf32>,
    return
  }
  func.func @transform_0(%arg0: i32, %arg1: i32) -> (i32, i32) {
    %c0_i32 = arith.constant 0 : i32
    return %arg0, %arg1 : i32, i32
  }
  func.func @transform_1(%arg0: i32, %arg1: i32) -> (i32, i32) {
    %c0_i32 = arith.constant 0 : i32
    %c0_i32_0 = arith.constant 0 : i32
    return %c0_i32, %arg1 : i32, i32
  }
  func.func @transform_2(%arg0: i32, %arg1: i32) -> (i32, i32) {
    %c0_i32 = arith.constant 0 : i32
    return %arg0, %arg1 : i32, i32
  }
}

</mosaic_0001>

<llo_original>
// kernel: tpu_custom_call.1
$region0: #{tpu_custom_call.1}
  #allocation0 [shape = 'u32[]', space=smem, size = 0x4, offset = 0x4, fixed_abs, tag = 'smem constant byte address 0x4 - core index']
  #allocation1 [shape = 'u32[72,128]{1,0:T(1,128)}', space=vmem, size = 0x9000, scoped, tag = 'internal scratch']
  %s0 = inlined_call_operand.hbm [shape: f32[4,128], index: 0, kind: input, shape index: {}]
  %s1 = inlined_call_operand.hbm [shape: f32[1,128], index: 1, kind: input, shape index: {}]
  %s2 = inlined_call_operand.hbm [shape: f32[4,128], index: 2, kind: output, shape index: {}]
  %s3 = sld [smem:[#allocation0]]
  $region26: #{tpu_custom_call.1} parent=0
    _
  %s5 = ssub.s32 1, %s3
  %s6 = scalar_select 0, %s5, %s3
  $region1: #{tpu_custom_call.1} parent=0
    #allocation2 [shape = 'u8[2048]{0}', space=vmem, size = 0x800, scoped, tag = 'input window, operand 0, single buffered']
    #allocation3 [shape = 's32[1]{0}', space=sflag, size = 0x4, scoped, tag = 'scoped memory for tpu_custom_call.1']
    #allocation4 [shape = 's32[1]{0}', space=sflag, size = 0x4, scoped, tag = 'scoped memory for tpu_custom_call.1']
    #allocation5 [shape = 'u8[512]{0}', space=vmem, size = 0x400, scoped, tag = 'input window, operand 1, single buffered']
    #allocation6 [shape = 's32[1]{0}', space=sflag, size = 0x4, scoped, tag = 'scoped memory for tpu_custom_call.1']
    #allocation7 [shape = 'u8[2048]{0}', space=vmem, size = 0x800, scoped, tag = 'output window, operand 0, single buffered']
    %7 = vsyncpa [#allocation3], 0
    %8 = vsyncpa [#allocation6], 0
    %9 = vsyncpa [#allocation4], 0
    // Predicated region
    $region2: #{tpu_custom_call.1} parent=1 // pred_check
      _
    $region3: #{tpu_custom_call.1} parent=1 // pred_check_branch
      %11 = sbr.rel (0) target = $region5
    $region4: #{tpu_custom_call.1} parent=1 // pred_region
      %13 = vsyncadd [#allocation3], 0
      %s15 = sshll.u32 %s0, 4
      %s16 = int_to_ptr.hbm [resolvable:$true] %s15
      %s17 = sshll.u32 [#allocation2], 4
      %s18 = int_to_ptr.vmem [resolvable:$true] %s17
      %20 = dma.hbm_to_vmem [thread:$0]  %s16, 64, %s18, [#allocation3]
    $region5: #{tpu_custom_call.1} parent=1 // pred_fallthru
      _
    // Predicated region
    $region6: #{tpu_custom_call.1} parent=1 // pred_check
      _
    $region7: #{tpu_custom_call.1} parent=1 // pred_check_branch
      %22 = sbr.rel (0) target = $region9
    $region8: #{tpu_custom_call.1} parent=1 // pred_region
      %24 = vsyncadd [#allocation6], 0
      %s26 = sshll.u32 %s1, 4
      %s27 = int_to_ptr.hbm [resolvable:$true] %s26
      %s28 = sshll.u32 [#allocation5], 4
      %s29 = int_to_ptr.vmem [resolvable:$true] %s28
      %31 = dma.hbm_to_vmem [thread:$0]  %s27, 16, %s29, [#allocation6]
    $region9: #{tpu_custom_call.1} parent=1 // pred_fallthru
      _
    // Predicated region
    $region10: #{tpu_custom_call.1} parent=1 // pred_check
      _
    $region11: #{tpu_custom_call.1} parent=1 // pred_check_branch
      %33 = sbr.rel (0) target = $region13
    $region12: #{tpu_custom_call.1} parent=1 // pred_region
      %35 = dma.done [#allocation3], 64
    $region13: #{tpu_custom_call.1} parent=1 // pred_fallthru
      _
    // Predicated region
    $region14: #{tpu_custom_call.1} parent=1 // pred_check
      _
    $region15: #{tpu_custom_call.1} parent=1 // pred_check_branch
      %37 = sbr.rel (0) target = $region17
    $region16: #{tpu_custom_call.1} parent=1 // pred_region
      %39 = dma.done [#allocation6], 16
    $region17: #{tpu_custom_call.1} parent=1 // pred_fallthru
      _
    %v40 = vld [vmem:[#allocation2] sm:$0xf]
    %v41 = vld [vmem:[#allocation5] sm:$0x1]
    %v43 = vperm.slane %v41, 0
    %v45 = vmul.f32 %v40, %v43
    %46 = vst [vmem:[#allocation7] sm:$0xf] %v45
    // Predicated region
    $region18: #{tpu_custom_call.1} parent=1 // pred_check
      _
    $region19: #{tpu_custom_call.1} parent=1 // pred_check_branch
      %48 = sbr.rel (0) target = $region21
    $region20: #{tpu_custom_call.1} parent=1 // pred_region
      %50 = vsyncadd [#allocation4], 0
      %s52 = sshll.u32 [#allocation7], 4
      %s53 = int_to_ptr.vmem [resolvable:$true] %s52
      %s54 = sshll.u32 %s2, 4
      %s55 = int_to_ptr.hbm [resolvable:$true] %s54
      %57 = dma.vmem_to_hbm [thread:$0]  %s53, 64, %s55, [#allocation4]
    $region21: #{tpu_custom_call.1} parent=1 // pred_fallthru
      _
    // Predicated region
    $region22: #{tpu_custom_call.1} parent=1 // pred_check
      _
    $region23: #{tpu_custom_call.1} parent=1 // pred_check_branch
      %59 = sbr.rel (0) target = $region25
    $region24: #{tpu_custom_call.1} parent=1 // pred_region
      %61 = dma.done [#allocation4], 64
    $region25: #{tpu_custom_call.1} parent=1 // pred_fallthru
      _
    %62 = vsyncpa [#allocation3], 1
    %63 = vsyncpa [#allocation6], 1
    %64 = vsyncpa [#allocation4], 1

</llo_original>
